<compile_context>
chip_gen: v5e
topology: v5e:2x2
jax: 0.10.0
libtpu: 0.0.40
codegen_flags: <defaults>
</compile_context>

<pallas_src>
import functools

import jax
import jax.numpy as jnp
from jax.experimental import pallas as pl
from jax.experimental.pallas import tpu as pltpu


def _round_up(x, m):
    return ((x + m - 1) // m) * m


def _tpu_vmem_capacity_bytes():
    """Best-effort per-core VMEM capacity query with a conservative fallback."""
    try:
        info = pltpu.get_tpu_info()
        for name in ("vmem_capacity_bytes", "vmem_size_bytes", "vmem_bytes"):
            cap = getattr(info, name, None)
            if cap:
                return int(cap)
    except Exception:
        pass
    # Assume the smallest current generation (v7x: 64 MiB) so auto-sizing
    # never overshoots physical VMEM when detection fails.
    return 64 * 2**20


def _spatial_gather_kernel(probs_ref, feats_ref, out_ref,
                           m_ref, l_ref, acc_ref,
                           *, scale, n_total, chunk_n, ragged, mxu_dtype):
    # probs_ref: (1, K, Nc)   feats_ref: (1, Ct, Nc)   out_ref: (1, Ct, K)
    # scratch:   m_ref (K,1) f32, l_ref (K,1) f32, acc_ref (Ct,K) f32
    n_idx = pl.program_id(2)
    num_n = pl.num_programs(2)

    @pl.when(n_idx == 0)
    def _init():
        m_ref[...] = jnp.full_like(m_ref, -jnp.inf)
        l_ref[...] = jnp.zeros_like(l_ref)
        acc_ref[...] = jnp.zeros_like(acc_ref)

    def _step(masked):
        p = probs_ref[0].astype(jnp.float32)            # (K, Nc) logits
        if scale != 1.0:                                # compile-time constant
            p = p * scale
        f = feats_ref[0]                                # (Ct, Nc), native dtype

        if masked:
            # Scrub the padded tail: probs -> -1e30 (exp -> 0), feats -> 0 so
            # out-of-bounds garbage (possibly NaN bit patterns) never hits the MXU.
            lane = jax.lax.broadcasted_iota(jnp.int32, (1, chunk_n), 1)
            valid = n_total - n_idx * chunk_n
            mask = lane < valid                         # (1, Nc)
            p = jnp.where(mask, p, -1e30)
            f = jnp.where(mask, f, jnp.zeros_like(f))

        # ---- online softmax statistics (f32) ----
        m_prev = m_ref[...]                                               # (K, 1)
        m_new = jnp.maximum(m_prev, jnp.max(p, axis=-1, keepdims=True))   # (K, 1)
        alpha = jnp.exp(m_prev - m_new)                                   # (K, 1)
        e = jnp.exp(p - m_new)                                            # (K, Nc)

        l_ref[...] = alpha * l_ref[...] + jnp.sum(e, axis=-1, keepdims=True)
        m_ref[...] = m_new

        # ---- partial context: (Ct, K) = f . e^T ----
        # Only the small (K, Nc) weight operand is transposed by Mosaic; the
        # big feats chunk is consumed as-is.  Optional bf16 MXU operands for
        # f32 feats (v7x); accumulation stays f32.
        f_mxu = f if mxu_dtype is None else f.astype(mxu_dtype)
        part = jax.lax.dot_general(
            f_mxu, e.astype(f_mxu.dtype),
            dimension_numbers=(((1,), (1,)), ((), ())),
            preferred_element_type=jnp.float32)                           # (Ct, K)
        acc_ref[...] = acc_ref[...] * jnp.transpose(alpha) + part

    if ragged:
        # Mask-free fast path on every chunk except the last (no extra
        # full-chunk VMEM traffic); only the tail chunk pays for the scrub.
        @pl.when(n_idx < num_n - 1)
        def _full():
            _step(False)

        @pl.when(n_idx == num_n - 1)
        def _tail():
            _step(True)
    else:
        _step(False)

    # ---- finalize: deferred normalization, write (Ct, K) once per (b, c) ----
    @pl.when(n_idx == num_n - 1)
    def _finalize():
        inv_l = pl.reciprocal(l_ref[...], approx=False)                   # (K, 1)
        out_ref[0] = (acc_ref[...] * jnp.transpose(inv_l)).astype(out_ref.dtype)


def spatial_gather(feats, probs, scale=1.0, *, chunk_n=None, c_tile=None,
                   mxu_dtype=None):
    """feats: (B, C, H, W), probs: (B, K, H, W) -> (B, C, K, 1).

    mxu_dtype: optional dtype for the MXU operands (e.g. jnp.bfloat16 on v7x
    for f32 feats).  Softmax stats and accumulation remain f32.
    Note: when feats/MXU operands are bf16, the denominator l is accumulated
    from f32 exp weights while the numerator uses bf16-rounded weights; the
    mismatch is at bf16 rounding level.
    """
    B, C, H, W = feats.shape
    Bp, K, Hp, Wp = probs.shape
    assert B == Bp and (H, W) == (Hp, Wp)
    N = H * W

    probs_flat = probs.reshape(B, K, N)
    feats_flat = feats.reshape(B, C, N)

    feat_bytes = jnp.dtype(feats.dtype).itemsize
    probs_bytes = jnp.dtype(probs.dtype).itemsize

    # ---- generation-aware sizing ------------------------------------------
    vmem_cap = _tpu_vmem_capacity_bytes()
    big_vmem = vmem_cap >= 96 * 2**20             # v5e/v6e (128 MiB) vs v7x (64 MiB)
    target_bytes = (8 if big_vmem else 6) * 2**20  # per feats chunk buffer
    nbuf = 3 if big_vmem else 2                    # input pipeline depth

    # ---- C tiling (parallel axis; gives v7x's 2nd TensorCore work) ---------
    if c_tile is None:
        c_tile = C
        if B < 2 and C >= 16 and C % 16 == 0:
            c_tile = C // 2
    else:
        c_tile = int(c_tile)
        assert C % c_tile == 0, "c_tile must divide C"
        assert c_tile == C or c_tile % 8 == 0, "c_tile must be a multiple of 8"
    num_c = C // c_tile

    # ---- spatial chunking ---------------------------------------------------
    n_pad = _round_up(N, 128)
    # Keep each strided feats DMA row segment >= ~2 KiB (512 f32 / 1024 bf16).
    min_chunk = max(128, _round_up(2048 // feat_bytes, 128))
    if chunk_n is None:
        nc = target_bytes // max(1, c_tile * feat_bytes)
        nc = max(min_chunk, (nc // 128) * 128)
        chunk_n = int(min(n_pad, nc))
    else:
        chunk_n = int(min(n_pad, max(min_chunk, _round_up(int(chunk_n), 128))))

    num_n = int(pl.cdiv(N, chunk_n))
    ragged = (N % chunk_n) != 0

    if mxu_dtype is not None:
        mxu_dtype = jnp.dtype(mxu_dtype)
        if mxu_dtype == jnp.dtype(feats.dtype):
            mxu_dtype = None

    kernel = functools.partial(
        _spatial_gather_kernel,
        scale=float(scale), n_total=N, chunk_n=chunk_n, ragged=ragged,
        mxu_dtype=mxu_dtype)

    # ---- VMEM budget --------------------------------------------------------
    feat_blk = c_tile * chunk_n * feat_bytes
    prob_blk = _round_up(K, 8) * chunk_n * probs_bytes
    out_blk = c_tile * _round_up(K, 128) * feat_bytes
    scratch_bytes = (c_tile + 16) * _round_up(K, 128) * 4
    est = nbuf * (feat_blk + prob_blk) + 2 * out_blk + scratch_bytes
    cap = (100 if big_vmem else 48) * 2**20
    vmem_limit = int(min(cap, max(32 * 2**20, 2 * est)))

    probs_idx = lambda b, c, n: (b, 0, n)   # re-fetched per C tile (cheap: K << C)
    feats_idx = lambda b, c, n: (b, c, n)
    out_idx = lambda b, c, n: (b, c, 0)     # resident across the reduction axis

    probs_spec = pl.BlockSpec((1, K, chunk_n), probs_idx)
    feats_spec = pl.BlockSpec((1, c_tile, chunk_n), feats_idx)
    if nbuf > 2:
        try:
            probs_spec = pl.BlockSpec((1, K, chunk_n), probs_idx,
                                      pipeline_mode=pl.Buffered(nbuf))
            feats_spec = pl.BlockSpec((1, c_tile, chunk_n), feats_idx,
                                      pipeline_mode=pl.Buffered(nbuf))
        except TypeError:
            pass  # older BlockSpec signature: fall back to default 2-deep

    out_bck = pl.pallas_call(
        kernel,
        out_shape=jax.ShapeDtypeStruct((B, C, K), feats.dtype),
        grid_spec=pltpu.PrefetchScalarGridSpec(
            num_scalar_prefetch=0,
            grid=(B, num_c, num_n),               # reduction axis last
            in_specs=[probs_spec, feats_spec],
            out_specs=pl.BlockSpec((1, c_tile, K), out_idx),
            scratch_shapes=[
                pltpu.VMEM((K, 1), jnp.float32),       # running max m
                pltpu.VMEM((K, 1), jnp.float32),       # running denom l
                pltpu.VMEM((c_tile, K), jnp.float32),  # context accumulator
            ],
        ),
        compiler_params=pltpu.CompilerParams(
            dimension_semantics=("parallel", "parallel", "arbitrary"),
            vmem_limit_bytes=vmem_limit,
        ),
    )(probs_flat, feats_flat)

    # (B, C, K) -> (B, C, K, 1)  (matches torch .permute(0, 2, 1).unsqueeze(3))
    return out_bck[..., None]


if __name__ == "__main__":
    key = jax.random.PRNGKey(0)
    kf, kp, kf2, kp2 = jax.random.split(key, 4)

    def reference(feats, probs, scale):
        B, C = feats.shape[0], feats.shape[1]
        K = probs.shape[1]
        p = jax.nn.softmax(scale * probs.reshape(B, K, -1).astype(jnp.float32), axis=2)
        f = feats.reshape(B, C, -1).astype(jnp.float32)
        return jnp.einsum("bkn,bcn->bck", p, f,
                          precision=jax.lax.Precision.HIGHEST)[..., None]

    B, C, K, H, W = 2, 64, 4, 32, 32      # N = 1024
    feats = jax.random.normal(kf, (B, C, H, W), dtype=jnp.float32)
    probs = jax.random.normal(kp, (B, K, H, W), dtype=jnp.float32)
    ref = reference(feats, probs, 1.0)

    # Case 1: multi N-chunk online softmax + C-tile split (2 C tiles x 2 chunks).
    out = spatial_gather(feats, probs, scale=1.0, chunk_n=512, c_tile=32)
    jax.block_until_ready(out)
    assert out.shape == (B, C, K, 1)
    assert jnp.allclose(out, ref, atol=1e-4, rtol=1e-4)

    # Case 2: ragged spatial size (N = 990, 2 chunks, masked tail only) + scale != 1.
    H2, W2 = 18, 55
    feats2 = jax.random.normal(kf2, (B, C, H2, W2), dtype=jnp.float32)
    probs2 = jax.random.normal(kp2, (B, K, H2, W2), dtype=jnp.float32)
    out2 = spatial_gather(feats2, probs2, scale=2.0, chunk_n=512)
    jax.block_until_ready(out2)
    ref2 = reference(feats2, probs2, 2.0)
    assert out2.shape == (B, C, K, 1)
    assert jnp.allclose(out2, ref2, atol=1e-4, rtol=1e-4)

    # Case 3: f32 feats with bf16 MXU operands (v7x recommendation) — looser tol.
    out3 = spatial_gather(feats, probs, scale=1.0, chunk_n=512, c_tile=32,
                          mxu_dtype=jnp.bfloat16)
    jax.block_until_ready(out3)
    assert jnp.allclose(out3, ref, atol=5e-3, rtol=5e-2)

    # Case 4: native bf16 inputs (halves the dominant HBM stream), auto sizing.
    feats_b = feats.astype(jnp.bfloat16)
    probs_b = probs.astype(jnp.bfloat16)
    out4 = spatial_gather(feats_b, probs_b, scale=1.0)
    jax.block_until_ready(out4)
    ref4 = reference(feats_b, probs_b, 1.0)
    assert out4.shape == (B, C, K, 1)
    assert jnp.allclose(out4.astype(jnp.float32), ref4, atol=1e-2, rtol=5e-2)

    print("KERNEL_OK")
</pallas_src>

<mosaic_0001>
module attributes {stable_mosaic.version = 11 : i64} {
  func.func @_spatial_gather_kernel(%arg0: i32, %arg1: i32, %arg2: i32, %arg3: memref<1x4x512xf32, #tpu.memory_space<vmem>>, %arg4: memref<1x32x512xf32, #tpu.memory_space<vmem>>, %arg5: memref<1x32x4xf32, #tpu.memory_space<vmem>>, %arg6: memref<4x1xf32, #tpu.memory_space<vmem>>, %arg7: memref<4x1xf32, #tpu.memory_space<vmem>>, %arg8: memref<32x4xf32, #tpu.memory_space<vmem>>) attributes {dimension_semantics = [#tpu.dimension_semantics<parallel>, #tpu.dimension_semantics<parallel>, #tpu.dimension_semantics<arbitrary>], iteration_bounds = array<i64: 2, 2, 2>, scalar_prefetch = 0 : i64, scratch_operands = 3 : i64, tpu.core_type = #tpu.core_type<tc>, window_params = [{transform_indices = @transform_0, window_bounds = array<i64: 1, 4, 512>}, {transform_indices = @transform_1, window_bounds = array<i64: 1, 32, 512>}, {transform_indices = @transform_2, window_bounds = array<i64: 1, 32, 4>}]} {
    %c0_i32 = arith.constant 0 : i32
    %0 = arith.cmpi eq, %arg2, %c0_i32 : i32
    %1 = arith.extui %0 : i1 to i32
    %c0_i32_0 = arith.constant 0 : i32
    %2 = arith.cmpi ne, %1, %c0_i32_0 : i32
    scf.if %2 {
      %cst_21 = arith.constant 0xFF800000 : f32
      %33 = vector.broadcast %cst_21 : f32 to vector<4x1xf32>
      %c0_22 = arith.constant 0 : index
      %c0_23 = arith.constant 0 : index
      %34 = vector.load %arg6[%c0_22, %c0_23] : memref<4x1xf32, #tpu.memory_space<vmem>>, vector<4x1xf32>
      tpu.vector_store %arg6[%c0_22, %c0_23], %33 {strides = array<i32>} : memref<4x1xf32, #tpu.memory_space<vmem>>, vector<4x1xf32>,
      %cst_24 = arith.constant 0.000000e+00 : f32
      %35 = vector.broadcast %cst_24 : f32 to vector<4x1xf32>
      %c0_25 = arith.constant 0 : index
      %c0_26 = arith.constant 0 : index
      %36 = vector.load %arg7[%c0_25, %c0_26] : memref<4x1xf32, #tpu.memory_space<vmem>>, vector<4x1xf32>
      tpu.vector_store %arg7[%c0_25, %c0_26], %35 {strides = array<i32>} : memref<4x1xf32, #tpu.memory_space<vmem>>, vector<4x1xf32>,
      %cst_27 = arith.constant 0.000000e+00 : f32
      %37 = vector.broadcast %cst_27 : f32 to vector<32x4xf32>
      %c0_28 = arith.constant 0 : index
      %c0_29 = arith.constant 0 : index
      %38 = vector.load %arg8[%c0_28, %c0_29] : memref<32x4xf32, #tpu.memory_space<vmem>>, vector<32x4xf32>
      tpu.vector_store %arg8[%c0_28, %c0_29], %37 {strides = array<i32>} : memref<32x4xf32, #tpu.memory_space<vmem>>, vector<32x4xf32>,
    } else {
    }
    %c0 = arith.constant 0 : index
    %c0_1 = arith.constant 0 : index
    %c0_2 = arith.constant 0 : index
    %3 = vector.load %arg3[%c0, %c0_1, %c0_2] : memref<1x4x512xf32, #tpu.memory_space<vmem>>, vector<1x4x512xf32>
    %4 = vector.shape_cast %3 : vector<1x4x512xf32> to vector<4x512xf32>
    %c0_3 = arith.constant 0 : index
    %c0_4 = arith.constant 0 : index
    %c0_5 = arith.constant 0 : index
    %5 = vector.load %arg4[%c0_3, %c0_4, %c0_5] : memref<1x32x512xf32, #tpu.memory_space<vmem>>, vector<1x32x512xf32>
    %6 = vector.shape_cast %5 : vector<1x32x512xf32> to vector<32x512xf32>
    %c0_6 = arith.constant 0 : index
    %c0_7 = arith.constant 0 : index
    %7 = vector.load %arg6[%c0_6, %c0_7] : memref<4x1xf32, #tpu.memory_space<vmem>>, vector<4x1xf32>
    %cst = arith.constant dense<0xFF800000> : vector<4xf32>
    %8 = vector.multi_reduction <maximumf>, %4, %cst [1] : vector<4x512xf32> to vector<4xf32>
    %9 = vector.shape_cast %8 : vector<4xf32> to vector<4x1xf32>
    %10 = arith.maximumf %7, %9 : vector<4x1xf32>
    %11 = arith.subf %7, %10 : vector<4x1xf32>
    %12 = math.exp %11 : vector<4x1xf32>
    %13 = vector.broadcast %10 : vector<4x1xf32> to vector<4x512xf32>
    %14 = arith.subf %4, %13 : vector<4x512xf32>
    %15 = math.exp %14 : vector<4x512xf32>
    %c0_8 = arith.constant 0 : index
    %c0_9 = arith.constant 0 : index
    %16 = vector.load %arg7[%c0_8, %c0_9] : memref<4x1xf32, #tpu.memory_space<vmem>>, vector<4x1xf32>
    %17 = arith.mulf %12, %16 : vector<4x1xf32>
    %cst_10 = arith.constant dense<0.000000e+00> : vector<4xf32>
    %18 = vector.multi_reduction <add>, %15, %cst_10 [1] : vector<4x512xf32> to vector<4xf32>
    %19 = vector.shape_cast %18 : vector<4xf32> to vector<4x1xf32>
    %20 = arith.addf %17, %19 : vector<4x1xf32>
    %c0_11 = arith.constant 0 : index
    %c0_12 = arith.constant 0 : index
    %21 = vector.load %arg7[%c0_11, %c0_12] : memref<4x1xf32, #tpu.memory_space<vmem>>, vector<4x1xf32>
    tpu.vector_store %arg7[%c0_11, %c0_12], %20 {strides = array<i32>} : memref<4x1xf32, #tpu.memory_space<vmem>>, vector<4x1xf32>,
    %c0_13 = arith.constant 0 : index
    %c0_14 = arith.constant 0 : index
    %22 = vector.load %arg6[%c0_13, %c0_14] : memref<4x1xf32, #tpu.memory_space<vmem>>, vector<4x1xf32>
    tpu.vector_store %arg6[%c0_13, %c0_14], %10 {strides = array<i32>} : memref<4x1xf32, #tpu.memory_space<vmem>>, vector<4x1xf32>,
    %cst_15 = arith.constant dense<0.000000e+00> : vector<32x4xf32>
    %23 = tpu.matmul %6, %15, %cst_15 {dimension_numbers = #tpu.dot_dimension_numbers<[1], [1], [0], [0], [0, 0, 1, 0], [], []>} : vector<32x512xf32>, vector<4x512xf32>, vector<32x4xf32> -> vector<32x4xf32>
    %c0_16 = arith.constant 0 : index
    %c0_17 = arith.constant 0 : index
    %24 = vector.load %arg8[%c0_16, %c0_17] : memref<32x4xf32, #tpu.memory_space<vmem>>, vector<32x4xf32>
    %25 = tpu.transpose %12, [1, 0] : vector<4x1xf32> -> vector<1x4xf32>
    %26 = vector.broadcast %25 : vector<1x4xf32> to vector<32x4xf32>
    %27 = arith.mulf %24, %26 : vector<32x4xf32>
    %28 = arith.addf %27, %23 : vector<32x4xf32>
    %c0_18 = arith.constant 0 : index
    %c0_19 = arith.constant 0 : index
    %29 = vector.load %arg8[%c0_18, %c0_19] : memref<32x4xf32, #tpu.memory_space<vmem>>, vector<32x4xf32>
    tpu.vector_store %arg8[%c0_18, %c0_19], %28 {strides = array<i32>} : memref<32x4xf32, #tpu.memory_space<vmem>>, vector<32x4xf32>,
    %c1_i32 = arith.constant 1 : i32
    %30 = arith.cmpi eq, %arg2, %c1_i32 : i32
    %31 = arith.extui %30 : i1 to i32
    %c0_i32_20 = arith.constant 0 : i32
    %32 = arith.cmpi ne, %31, %c0_i32_20 : i32
    scf.if %32 {
      %c0_21 = arith.constant 0 : index
      %c0_22 = arith.constant 0 : index
      %33 = vector.load %arg7[%c0_21, %c0_22] : memref<4x1xf32, #tpu.memory_space<vmem>>, vector<4x1xf32>
      %34 = tpu.reciprocal %33 : vector<4x1xf32> -> vector<4x1xf32>
      %c0_23 = arith.constant 0 : index
      %c0_24 = arith.constant 0 : index
      %35 = vector.load %arg8[%c0_23, %c0_24] : memref<32x4xf32, #tpu.memory_space<vmem>>, vector<32x4xf32>
      %36 = tpu.transpose %34, [1, 0] : vector<4x1xf32> -> vector<1x4xf32>
      %37 = vector.broadcast %36 : vector<1x4xf32> to vector<32x4xf32>
      %38 = arith.mulf %35, %37 : vector<32x4xf32>
      %c0_25 = arith.constant 0 : index
      %c0_26 = arith.constant 0 : index
      %c0_27 = arith.constant 0 : index
      %39 = vector.load %arg5[%c0_25, %c0_26, %c0_27] : memref<1x32x4xf32, #tpu.memory_space<vmem>>, vector<1x32x4xf32>
      %40 = vector.shape_cast %39 : vector<1x32x4xf32> to vector<32x4xf32>
      %41 = vector.shape_cast %38 : vector<32x4xf32> to vector<1x32x4xf32>
      tpu.vector_store %arg5[%c0_25, %c0_26, %c0_27], %41 {strides = array<i32>} : memref<1x32x4xf32, #tpu.memory_space<vmem>>, vector<1x32x4xf32>,
    } else {
    }
    return
  }
  func.func @transform_0(%arg0: i32, %arg1: i32, %arg2: i32) -> (i32, i32, i32) {
    %c0_i32 = arith.constant 0 : i32
    %c0_i32_0 = arith.constant 0 : i32
    return %arg0, %c0_i32, %arg2 : i32, i32, i32
  }
  func.func @transform_1(%arg0: i32, %arg1: i32, %arg2: i32) -> (i32, i32, i32) {
    %c0_i32 = arith.constant 0 : i32
    return %arg0, %arg1, %arg2 : i32, i32, i32
  }
  func.func @transform_2(%arg0: i32, %arg1: i32, %arg2: i32) -> (i32, i32, i32) {
    %c0_i32 = arith.constant 0 : i32
    %c0_i32_0 = arith.constant 0 : i32
    return %arg0, %arg1, %c0_i32 : i32, i32, i32
  }
}

</mosaic_0001>

<llo_original>
// kernel: tpu_custom_call.1
$region0: #{tpu_custom_call.1}
  #allocation0 [shape = 'u32[]', space=smem, size = 0x4, offset = 0x4, fixed_abs, tag = 'smem constant byte address 0x4 - core index']
  #allocation1 [shape = 'u32[72,128]{1,0:T(1,128)}', space=vmem, size = 0x9000, scoped, tag = 'internal scratch']
  #allocation2 [shape = 'f32[4,1]{1,0:T(4,128)}', space=vmem, size = 0x800, scoped, tag = 'scratch operand']
  #allocation3 [shape = 'f32[4,1]{1,0:T(4,128)}', space=vmem, size = 0x800, scoped, tag = 'scratch operand']
  #allocation4 [shape = 'f32[32,4]{1,0:T(8,128)}', space=vmem, size = 0x4000, scoped, tag = 'scratch operand']
  %s0 = inlined_call_operand.hbm [shape: f32[2,4,1024], index: 0, kind: input, shape index: {}]
  %s1 = inlined_call_operand.hbm [shape: f32[2,64,1024], index: 1, kind: input, shape index: {}]
  %s2 = inlined_call_operand.vmem [shape: f32[2,64,4], index: 2, kind: output, shape index: {}]
  %s3 = sld [smem:[#allocation0]]
  $region57: #{tpu_custom_call.1} parent=0
    _
  %s5 = ssub.s32 1, %s3
  %s6 = scalar_select 0, %s5, %s3
  $region1: #{tpu_custom_call.1} parent=0
    #allocation5 [shape = 'u8[16384]{0}', space=vmem, size = 0x4000, scoped, tag = 'input window, operand 0']
    #allocation6 [shape = 's32[2]{0}', space=sflag, size = 0x8, scoped, tag = 'scoped memory for tpu_custom_call.1']
    #allocation7 [shape = 'u8[131072]{0}', space=vmem, size = 0x20000, scoped, tag = 'input window, operand 1']
    #allocation8 [shape = 's32[2]{0}', space=sflag, size = 0x8, scoped, tag = 'scoped memory for tpu_custom_call.1']
    %7 = vsyncpa [#allocation6], 0
    %s8 = scalar_lea.sflag [#allocation6], 1
    %9 = vsyncpa %s8, 0
    %10 = vsyncpa [#allocation8], 0
    %s11 = scalar_lea.sflag [#allocation8], 1
    %12 = vsyncpa %s11, 0
    loop: start=0, step=1, limit=10
    $region2: #{tpu_custom_call.1} parent=1 // loop_pre_header
      _
    $region3: #{tpu_custom_call.1} parent=1 // loop_header
      %s14 = sphi 0, %s18
      %p15 = scmp.ge.s32.totalorder %s14, 10
      %s21 = sphi 0, %s40
      %s22 = sphi 0, %s36
      %s23 = sphi 0, %s32
      %s24 = sphi 0, %s21
      %s25 = sphi 0, %s22
      %s26 = sphi 0, %s23
      %s27 = sphi 0, %s24
      %s28 = sphi 0, %s25
      %s29 = sphi 0, %s26
      %s45 = sphi 0, %s47
      %s48 = sphi 0, %s45
      %s49 = sphi 0, %s48
      %s65 = sphi 0, %s49
      %s75 = sphi 0, %s77
      %s78 = sphi 0, %s75
      %s79 = sphi 0, %s78
      %s95 = sphi 0, %s79
      %s103 = sphi 0, %s105
      %s106 = sphi 0, %s103
      %s107 = sphi 0, %s106
      %s123 = sphi 0, %s107
    $region4: #{tpu_custom_call.1} parent=1 // loop_header_branch
      %17 = sbr.rel (%p15) target = $region8
    $region5: #{tpu_custom_call.1} parent=1 // loop_body
      %s19 = ssub.s32 %s14, 1
      %s20 = ssub.s32 %s14, 2
      %s30 = sadd.s32 1, %s23
      %p31 = scmp.ge.s32.totalorder %s30, 2
      %s32 = scalar_select %p31, 0, %s30
      %s33 = sadd.s32 1, %s22
      %s34 = scalar_select %p31, %s33, %s22
      %p35 = scmp.ge.s32.totalorder %s34, 2
      %s36 = scalar_select %p35, 0, %s34
      %s37 = sadd.s32 1, %s21
      %s38 = scalar_select %p35, %s37, %s21
      %p39 = scmp.ge.s32.totalorder %s38, 2
      %s40 = scalar_select %p39, 0, %s38
      %s41 = ssub.s32 %s21, %s40
      %s42 = ssub.s32 %s23, %s32
      %s43 = sor.u32 %s41, %s42
      %p44 = scmp.eq.s32.totalorder %s43, 0
      %s46 = sadd.s32 %s45, 1
      %s47 = scalar_select %p44, %s45, %s46
      %p50 = pneg %p44
      %p51 = scmp.eq.s32.totalorder %s14, 7
      %p52 = por %p50, %p51
      %p53 = scmp.ne.s32.totalorder %s45, %s48
      %p54 = scmp.eq.s32.totalorder %s14, 0
      %p55 = por %p53, %p54
      %p56 = scmp.ne.s32.totalorder %s45, %s48
      %p57 = scmp.eq.s32.totalorder %s19, 7
      %p58 = por %p56, %p57
      %p59 = scmp.ne.s32.totalorder %s48, %s49
      %p60 = scmp.eq.s32.totalorder %s19, 0
      %p61 = por %p59, %p60
      %p62 = scmp.ne.s32.totalorder %s48, %s49
      %p63 = scmp.eq.s32.totalorder %s20, 7
      %p64 = por %p62, %p63
      %p66 = scmp.ne.s32.totalorder %s49, %s65
      %p67 = scmp.eq.s32.totalorder %s20, 0
      %p68 = por %p66, %p67
      %s69 = ssub.s32 %s21, %s40
      %s70 = ssub.s32 %s22, %s36
      %s71 = sor.u32 %s69, %s70
      %s72 = ssub.s32 %s23, %s32
      %s73 = sor.u32 %s71, %s72
      %p74 = scmp.eq.s32.totalorder %s73, 0
      %s76 = sadd.s32 %s75, 1
      %s77 = scalar_select %p74, %s75, %s76
      %p80 = pneg %p74
      %p81 = scmp.eq.s32.totalorder %s14, 7
      %p82 = por %p80, %p81
      %p83 = scmp.ne.s32.totalorder %s75, %s78
      %p84 = scmp.eq.s32.totalorder %s14, 0
      %p85 = por %p83, %p84
      %p86 = scmp.ne.s32.totalorder %s75, %s78
      %p87 = scmp.eq.s32.totalorder %s19, 7
      %p88 = por %p86, %p87
      %p89 = scmp.ne.s32.totalorder %s78, %s79
      %p90 = scmp.eq.s32.totalorder %s19, 0
      %p91 = por %p89, %p90
      %p92 = scmp.ne.s32.totalorder %s78, %s79
      %p93 = scmp.eq.s32.totalorder %s20, 7
      %p94 = por %p92, %p93
      %p96 = scmp.ne.s32.totalorder %s79, %s95
      %p97 = scmp.eq.s32.totalorder %s20, 0
      %p98 = por %p96, %p97
      %s99 = ssub.s32 %s21, %s40
      %s100 = ssub.s32 %s22, %s36
      %s101 = sor.u32 %s99, %s100
      %p102 = scmp.eq.s32.totalorder %s101, 0
      %s104 = sadd.s32 %s103, 1
      %s105 = scalar_select %p102, %s103, %s104
      %p108 = pneg %p102
      %p109 = scmp.eq.s32.totalorder %s14, 7
      %p110 = por %p108, %p109
      %p111 = scmp.ne.s32.totalorder %s103, %s106
      %p112 = scmp.eq.s32.totalorder %s14, 0
      %p113 = por %p111, %p112
      %p114 = scmp.ne.s32.totalorder %s103, %s106
      %p115 = scmp.eq.s32.totalorder %s19, 7
      %p116 = por %p114, %p115
      %p117 = scmp.ne.s32.totalorder %s106, %s107
      %p118 = scmp.eq.s32.totalorder %s19, 0
      %p119 = por %p117, %p118
      %p120 = scmp.ne.s32.totalorder %s106, %s107
      %p121 = scmp.eq.s32.totalorder %s20, 7
      %p122 = por %p120, %p121
      %p124 = scmp.ne.s32.totalorder %s107, %s123
      %p125 = scmp.eq.s32.totalorder %s20, 0
      %p126 = por %p124, %p125
      %p127 = scmp.le.s32.totalorder 1, %s14
      %p128 = scmp.lt.s32.totalorder %s14, 9
      %p129 = pnand %p127, %p128
      %p130 = pneg %p129
      // Predicated region
      $region9: #{tpu_custom_call.1} parent=5 // pred_check
        _
      $region10: #{tpu_custom_call.1} parent=5 // pred_check_branch
        %132 = sbr.rel (%p129) target = $region12
      $region11: #{tpu_custom_call.1} parent=5 // pred_region
        %s133 = ssub.s32 %s14, 1
      $region12: #{tpu_custom_call.1} parent=5 // pred_fallthru
        _
      %p134 = scmp.lt.s32.totalorder %s14, 8
      // Predicated region
      $region13: #{tpu_custom_call.1} parent=5 // pred_check
        %p135 = pneg %p134
      $region14: #{tpu_custom_call.1} parent=5 // pred_check_branch
        %137 = sbr.rel (%p135) target = $region16
      $region15: #{tpu_custom_call.1} parent=5 // pred_region
        // Predicated region
        $region17: #{tpu_custom_call.1} parent=15 // pred_check
          %p138 = pneg %p55
        $region18: #{tpu_custom_call.1} parent=15 // pred_check_branch
          %140 = sbr.rel (%p138) target = $region20
        $region19: #{tpu_custom_call.1} parent=15 // pred_region
          %s141 = sand.u32 %s45, 1
          %s142 = scalar_lea.sflag [#allocation6], %s141
          %s143 = sand.u32 %s45, 1
          %s144 = smul.addr %s143, 16
          %s145 = scalar_lea.vmem [#allocation5], %s144
          %s146 = smul.u32 4, %s23
          %148 = vsyncadd %s142, 0
          %s149 = smul.addr %s21, 8
          %s150 = sadd.s32 %s146, %s149
          %s151 = smul.addr %s150, 4
          %s152 = scalar_lea.hbm %s0, %s151
          %s154 = sshll.u32 %s152, 4
          %s155 = int_to_ptr.hbm [resolvable:$true] %s154
          %s156 = sshll.u32 %s145, 4
          %s157 = int_to_ptr.vmem [resolvable:$true] %s156
          %159 = dma.hbm_to_vmem [thread:$0]  %s155, 256, %s157, %s142
        $region20: #{tpu_custom_call.1} parent=15 // pred_fallthru
          _
        // Predicated region
        $region21: #{tpu_custom_call.1} parent=15 // pred_check
          %p160 = pneg %p85
        $region22: #{tpu_custom_call.1} parent=15 // pred_check_branch
          %162 = sbr.rel (%p160) target = $region24
        $region23: #{tpu_custom_call.1} parent=15 // pred_region
          %s163 = sand.u32 %s75, 1
          %s164 = scalar_lea.sflag [#allocation8], %s163
          %s165 = sand.u32 %s75, 1
          %s166 = smul.addr %s165, 128
          %s167 = scalar_lea.vmem [#allocation7], %s166
          %s168 = smul.u32 4, %s22
          %s169 = smul.u32 4, %s23
          %171 = vsyncadd %s164, 0
          %s172 = smul.addr %s168, 8
          %s173 = sadd.s32 %s169, %s172
          %s174 = smul.addr %s21, 64
          %s175 = sadd.s32 %s173, %s174
          %s176 = smul.addr %s175, 8
          %s177 = scalar_lea.hbm %s1, %s176
          %s178 = sshll.u32 %s177, 4
          %s179 = int_to_ptr.hbm [resolvable:$true] %s178
          %s180 = sshll.u32 %s167, 4
          %s181 = int_to_ptr.vmem [resolvable:$true] %s180
          %186 = dma.hbm_to_vmem [thread:$0]  %s179, 2048, %s181, %s164, 1024, 512, 32
        $region24: #{tpu_custom_call.1} parent=15 // pred_fallthru
          _
      $region16: #{tpu_custom_call.1} parent=5 // pred_fallthru
        _
      %p187 = scmp.le.s32.totalorder 1, %s14
      %p188 = scmp.lt.s32.totalorder %s14, 9
      %p189 = pnand %p187, %p188
      %p190 = pneg %p189
      // Predicated region
      $region25: #{tpu_custom_call.1} parent=5 // pred_check
        _
      $region26: #{tpu_custom_call.1} parent=5 // pred_check_branch
        %192 = sbr.rel (%p189) target = $region28
      $region27: #{tpu_custom_call.1} parent=5 // pred_region
        %s193 = ssub.s32 %s14, 1
        %s194 = sand.u32 %s48, 1
        %s195 = scalar_lea.sflag [#allocation6], %s194
        %s196 = sand.u32 %s48, 1
        %s197 = smul.addr %s196, 16
        %s198 = scalar_lea.vmem [#allocation5], %s197
        // Predicated region
        $region29: #{tpu_custom_call.1} parent=27 // pred_check
          %p199 = pneg %p61
        $region30: #{tpu_custom_call.1} parent=27 // pred_check_branch
          %201 = sbr.rel (%p199) target = $region32
        $region31: #{tpu_custom_call.1} parent=27 // pred_region
          %203 = dma.done %s195, 256
        $region32: #{tpu_custom_call.1} parent=27 // pred_fallthru
          _
        %s204 = sand.u32 %s78, 1
        %s205 = scalar_lea.sflag [#allocation8], %s204
        %s206 = sand.u32 %s78, 1
        %s207 = smul.addr %s206, 128
        %s208 = scalar_lea.vmem [#allocation7], %s207
        // Predicated region
        $region33: #{tpu_custom_call.1} parent=27 // pred_check
          %p209 = pneg %p91
        $region34: #{tpu_custom_call.1} parent=27 // pred_check_branch
          %211 = sbr.rel (%p209) target = $region36
        $region35: #{tpu_custom_call.1} parent=27 // pred_region
          %213 = dma.done %s205, 2048
        $region36: #{tpu_custom_call.1} parent=27 // pred_fallthru
          _
        %s214 = sand.u32 %s48, 1
        %s215 = scalar_lea.sflag [#allocation6], %s214
        %s216 = sand.u32 %s48, 1
        %s217 = smul.addr %s216, 16
        %s218 = scalar_lea.vmem [#allocation5], %s217
        %p219 = pneg %p61
        %p220 = pneg %p58
        %s221 = sand.u32 %s78, 1
        %s222 = scalar_lea.sflag [#allocation8], %s221
        %s223 = sand.u32 %s78, 1
        %s224 = smul.addr %s223, 128
        %s225 = scalar_lea.vmem [#allocation7], %s224
        %p226 = pneg %p91
        %p227 = pneg %p88
        %p228 = pneg %p119
        %p229 = pneg %p116
        %s230 = smul.u32 4, %s25
        %p231 = scmp.lt.s32.totalorder %s24, 1
        %s232 = scalar_select %p231, %s24, 1
        %p233 = scmp.lt.s32.totalorder %s230, 7
        %s234 = scalar_select %p233, %s230, 7
        %s235 = smul.addr %s232, 8
        %s236 = sadd.s32 %s234, %s235
        %s237 = smul.addr %s236, 8
        %s238 = scalar_lea.vmem %s2, %s237
        %s239 = smul.u32 4, %s26
        %s240 = smul.u32 4, %s25
        %s241 = smul.u32 4, %s26
        %s242 = smul.u32 4, %s25
        %p243 = scmp.lt.s32.totalorder %s24, 1
        %s244 = scalar_select %p243, %s24, 1
        %p245 = scmp.lt.s32.totalorder %s242, 7
        %s246 = scalar_select %p245, %s242, 7
        %s247 = smul.addr %s244, 8
        %s248 = sadd.s32 %s246, %s247
        %s249 = smul.addr %s248, 8
        %s250 = scalar_lea.vmem %s2, %s249
        %s251 = smul.u32 4, %s25
        %p252 = scmp.eq.s32.totalorder %s26, 0
        // Predicated region
        $region37: #{tpu_custom_call.1} parent=27 // pred_check
          %p253 = pneg %p252
        $region38: #{tpu_custom_call.1} parent=27 // pred_check_branch
          %255 = sbr.rel (%p253) target = $region40
        $region39: #{tpu_custom_call.1} parent=27 // pred_region
          %vm256 = vcmask 3072
          %257 = vst.msk [vmem:[#allocation2] sm:$0xf] %vm256, -inf
          %258 = vst.msk [vmem:[#allocation3] sm:$0xf] %vm256, 0.0
          %vm259 = vcmask 31744
          %260 = vst.msk [vmem:[#allocation4] sm:$0xff] %vm259, 0.0
          %261 = vst.msk [vmem:[#allocation4 + $0x8] sm:$0xff] %vm259, 0.0
          %262 = vst.msk [vmem:[#allocation4 + $0x10] sm:$0xff] %vm259, 0.0
          %263 = vst.msk [vmem:[#allocation4 + $0x18] sm:$0xff] %vm259, 0.0
        $region40: #{tpu_custom_call.1} parent=27 // pred_fallthru
          _
        %v264 = vld [vmem:[%s198] sm:$0xff]
        %v265 = vld [vmem:[%s198 + $0x8] sm:$0xff]
        %v266 = vld [vmem:[%s208] sm:$0xff]
        %v267 = vld [vmem:[%s208 + $0x8] sm:$0xff]
        %v268 = vld [vmem:[%s208 + $0x10] sm:$0xff]
        %v269 = vld [vmem:[%s208 + $0x18] sm:$0xff]
        %v270 = vld [vmem:[%s208 + $0x20] sm:$0xff]
        %v271 = vld [vmem:[%s208 + $0x28] sm:$0xff]
        %v272 = vld [vmem:[%s208 + $0x30] sm:$0xff]
        %v273 = vld [vmem:[%s208 + $0x38] sm:$0xff]
        %v274 = vld [vmem:[%s208 + $0x40] sm:$0xff]
        %v275 = vld [vmem:[%s208 + $0x48] sm:$0xff]
        %v276 = vld [vmem:[%s208 + $0x50] sm:$0xff]
        %v277 = vld [vmem:[%s208 + $0x58] sm:$0xff]
        %v278 = vld [vmem:[%s208 + $0x60] sm:$0xff]
        %v279 = vld [vmem:[%s208 + $0x68] sm:$0xff]
        %v280 = vld [vmem:[%s208 + $0x70] sm:$0xff]
        %v281 = vld [vmem:[%s208 + $0x78] sm:$0xff]
        %v282 = vld [vmem:[#allocation2] sm:$0xf]
        %285 = vst [vmem:[#allocation1] ss:$2 sm:$0xff] %v264
        %s286 = scalar_lea.vmem [#allocation1], 16
        %287 = vst [vmem:[%s286] ss:$2 sm:$0xff] %v265
        %v288 = vld.sshfl [vmem:[#allocation1] sm:$0xff pattern:$0x75316420]
        %v289 = vld.sshfl [vmem:[#allocation1 + $0x8] sm:$0xff pattern:$0x75316420]
        %v290 = vld.sshfl [vmem:[#allocation1 + $0x10] sm:$0xff pattern:$0x75316420]
        %v291 = vld.sshfl [vmem:[#allocation1 + $0x18] sm:$0xff pattern:$0x75316420]
        %vm296 = vcmask 1043456
        %v297 = vsel %vm296, %v288, -inf
        %v298 = vsel %vm296, %v289, -inf
        %v299 = vsel %vm296, %v290, -inf
        %v300 = vsel %vm296, %v291, -inf
        %v301 = vmax.f32 %v297, %v298
        %v302 = vmax.f32 %v299, %v300
        %v303 = vmax.f32 %v301, %v302
        %304 = vmax.xlane.f32.xlu0 %v303
        %v305 = vpop.xlane.xlu0 %304
        %v306 = vmax.f32 %v282, %v305
        %v307 = vsub.f32 %v282, %v306
        %v308 = vmul.f32 %v307, 1.442695
        %v309 = vpow.pop %v308
        %311 = vset.pattern.permute.xlu0 0
        %312 = vperm.xlu0 %311, %v306
        %v313 = vpop.permute.xlu0 %312
        %v315 = vunpack.c.l.s4 839922192
        %v316 = vunpack.c.0.s8 %v315
        %v317 = vperm.slane %v313, %v316
        %v319 = vsub.f32 %v264, %v317
        %v320 = vsub.f32 %v265, %v317
        %v321 = vmul.f32 %v319, 1.442695
        %v322 = vpow.pop %v321
        %v323 = vmul.f32 %v320, 1.442695
        %v324 = vpow.pop %v323
        %v325 = vld [vmem:[#allocation3] sm:$0xf]
        %v326 = vmul.f32 %v309, %v325
        %329 = vst [vmem:[#allocation1] ss:$2 sm:$0xff] %v322
        %s330 = scalar_lea.vmem [#allocation1], 16
        %331 = vst [vmem:[%s330] ss:$2 sm:$0xff] %v324
        %v332 = vld.sshfl [vmem:[#allocation1] sm:$0xff pattern:$0x75316420]
        %v333 = vld.sshfl [vmem:[#allocation1 + $0x8] sm:$0xff pattern:$0x75316420]
        %v334 = vld.sshfl [vmem:[#allocation1 + $0x10] sm:$0xff pattern:$0x75316420]
        %v335 = vld.sshfl [vmem:[#allocation1 + $0x18] sm:$0xff pattern:$0x75316420]
        %v340 = vsel %vm296, %v332, 0.0
        %v341 = vsel %vm296, %v333, 0.0
        %v342 = vadd.f32 %v340, %v341
        %v343 = vsel %vm296, %v334, 0.0
        %v344 = vadd.f32 %v342, %v343
        %v345 = vsel %vm296, %v335, 0.0
        %v346 = vadd.f32 %v344, %v345
        %347 = vadd.xlane.f32.xlu0 %v346
        %v348 = vpop.xlane.xlu0 %347
        %v349 = vadd.f32 %v326, %v348
        %vm350 = vcmask 3072
        %351 = vst.msk [vmem:[#allocation3] sm:$0xf] %vm350, %v349
        %352 = vst.msk [vmem:[#allocation2] sm:$0xf] %vm350, %v306
        %353 = vst [vmem:[#allocation1] ss:$2 sm:$0xff] %v322
        %s354 = scalar_lea.vmem [#allocation1], 16
        %355 = vst [vmem:[%s354] ss:$2 sm:$0xff] %v324
        %v356 = vld.sshfl [vmem:[#allocation1] sm:$0xff pattern:$0x75316420]
        %v357 = vld.sshfl [vmem:[#allocation1 + $0x8] sm:$0xff pattern:$0x75316420]
        %v358 = vld.sshfl [vmem:[#allocation1 + $0x10] sm:$0xff pattern:$0x75316420]
        %v359 = vld.sshfl [vmem:[#allocation1 + $0x18] sm:$0xff pattern:$0x75316420]
        %364 = vmatpush.xpose.msra.mxu0 0.0
        %365 = vmatpush.xpose.msra.mxu0 0.0
        %366 = vmatpush.xpose.msra.mxu0 0.0
        %367 = vmatpush.xpose.msra.mxu0 0.0
        %368 = vmatpush.xpose.msra.mxu0 0.0
        %369 = vmatpush.xpose.msra.mxu0 0.0
        %370 = vmatpush.xpose.msra.mxu0 0.0
        %371 = vmatpush.xpose.msra.mxu0 0.0
        %372 = vmatpush.xpose.msra.mxu0 0.0
        %373 = vmatpush.xpose.msra.mxu0 0.0
        %374 = vmatpush.xpose.msra.mxu0 0.0
        %375 = vmatpush.xpose.msra.mxu0 0.0
        %376 = vmatpush.xpose.msra.mxu0 0.0
        %377 = vmatpush.xpose.msra.mxu0 0.0
        %378 = vmatpush.xpose.msra.mxu0 0.0
        %379 = vmatpush.xpose.msra.mxu0 %v356
        %380 = vmatmul.f32.gmra.mxu0 %v266
        %v381 = vpop.f32.mrf.mxu0
        %v382 = vadd.f32 0.0, %v381
        %383 = vmatmul.f32.gmra.mxu0 %v270
        %v384 = vpop.f32.mrf.mxu0
        %v385 = vadd.f32 0.0, %v384
        %386 = vmatmul.f32.gmra.mxu0 %v274
        %v387 = vpop.f32.mrf.mxu0
        %v388 = vadd.f32 0.0, %v387
        %389 = vmatmul.f32.gmra.mxu0 %v278
        %v390 = vpop.f32.mrf.mxu0
        %v391 = vadd.f32 0.0, %v390
        %392 = vdwg.mxu0
        %393 = vmatpush.xpose.msra.mxu0 0.0
        %394 = vmatpush.xpose.msra.mxu0 0.0
        %395 = vmatpush.xpose.msra.mxu0 0.0
        %396 = vmatpush.xpose.msra.mxu0 0.0
        %397 = vmatpush.xpose.msra.mxu0 0.0
        %398 = vmatpush.xpose.msra.mxu0 0.0
        %399 = vmatpush.xpose.msra.mxu0 0.0
        %400 = vmatpush.xpose.msra.mxu0 0.0
        %401 = vmatpush.xpose.msra.mxu0 0.0
        %402 = vmatpush.xpose.msra.mxu0 0.0
        %403 = vmatpush.xpose.msra.mxu0 0.0
        %404 = vmatpush.xpose.msra.mxu0 0.0
        %405 = vmatpush.xpose.msra.mxu0 0.0
        %406 = vmatpush.xpose.msra.mxu0 0.0
        %407 = vmatpush.xpose.msra.mxu0 0.0
        %408 = vmatpush.xpose.msra.mxu0 %v357
        %409 = vmatmul.f32.gmra.mxu0 %v267
        %v410 = vpop.f32.mrf.mxu0
        %v411 = vadd.f32 %v382, %v410
        %412 = vmatmul.f32.gmra.mxu0 %v271
        %v413 = vpop.f32.mrf.mxu0
        %v414 = vadd.f32 %v385, %v413
        %415 = vmatmul.f32.gmra.mxu0 %v275
        %v416 = vpop.f32.mrf.mxu0
        %v417 = vadd.f32 %v388, %v416
        %418 = vmatmul.f32.gmra.mxu0 %v279
        %v419 = vpop.f32.mrf.mxu0
        %v420 = vadd.f32 %v391, %v419
        %421 = vdwg.mxu0
        %422 = vmatpush.xpose.msra.mxu0 0.0
        %423 = vmatpush.xpose.msra.mxu0 0.0
        %424 = vmatpush.xpose.msra.mxu0 0.0
        %425 = vmatpush.xpose.msra.mxu0 0.0
        %426 = vmatpush.xpose.msra.mxu0 0.0
        %427 = vmatpush.xpose.msra.mxu0 0.0
        %428 = vmatpush.xpose.msra.mxu0 0.0
        %429 = vmatpush.xpose.msra.mxu0 0.0
        %430 = vmatpush.xpose.msra.mxu0 0.0
        %431 = vmatpush.xpose.msra.mxu0 0.0
        %432 = vmatpush.xpose.msra.mxu0 0.0
        %433 = vmatpush.xpose.msra.mxu0 0.0
        %434 = vmatpush.xpose.msra.mxu0 0.0
        %435 = vmatpush.xpose.msra.mxu0 0.0
        %436 = vmatpush.xpose.msra.mxu0 0.0
        %437 = vmatpush.xpose.msra.mxu0 %v358
        %438 = vmatmul.f32.gmra.mxu0 %v268
        %v439 = vpop.f32.mrf.mxu0
        %v440 = vadd.f32 %v411, %v439
        %441 = vmatmul.f32.gmra.mxu0 %v272
        %v442 = vpop.f32.mrf.mxu0
        %v443 = vadd.f32 %v414, %v442
        %444 = vmatmul.f32.gmra.mxu0 %v276
        %v445 = vpop.f32.mrf.mxu0
        %v446 = vadd.f32 %v417, %v445
        %447 = vmatmul.f32.gmra.mxu0 %v280
        %v448 = vpop.f32.mrf.mxu0
        %v449 = vadd.f32 %v420, %v448
        %450 = vdwg.mxu0
        %451 = vmatpush.xpose.msra.mxu0 0.0
        %452 = vmatpush.xpose.msra.mxu0 0.0
        %453 = vmatpush.xpose.msra.mxu0 0.0
        %454 = vmatpush.xpose.msra.mxu0 0.0
        %455 = vmatpush.xpose.msra.mxu0 0.0
        %456 = vmatpush.xpose.msra.mxu0 0.0
        %457 = vmatpush.xpose.msra.mxu0 0.0
        %458 = vmatpush.xpose.msra.mxu0 0.0
        %459 = vmatpush.xpose.msra.mxu0 0.0
        %460 = vmatpush.xpose.msra.mxu0 0.0
        %461 = vmatpush.xpose.msra.mxu0 0.0
        %462 = vmatpush.xpose.msra.mxu0 0.0
        %463 = vmatpush.xpose.msra.mxu0 0.0
        %464 = vmatpush.xpose.msra.mxu0 0.0
        %465 = vmatpush.xpose.msra.mxu0 0.0
        %466 = vmatpush.xpose.msra.mxu0 %v359
        %467 = vmatmul.f32.gmra.mxu0 %v269
        %v468 = vpop.f32.mrf.mxu0
        %v469 = vadd.f32 %v440, %v468
        %470 = vmatmul.f32.gmra.mxu0 %v273
        %v471 = vpop.f32.mrf.mxu0
        %v472 = vadd.f32 %v443, %v471
        %473 = vmatmul.f32.gmra.mxu0 %v277
        %v474 = vpop.f32.mrf.mxu0
        %v475 = vadd.f32 %v446, %v474
        %476 = vmatmul.f32.gmra.mxu0 %v281
        %v477 = vpop.f32.mrf.mxu0
        %v478 = vadd.f32 %v449, %v477
        %479 = vdwg.mxu0
        %v480 = vld [vmem:[#allocation4] sm:$0xff]
        %v481 = vld [vmem:[#allocation4 + $0x8] sm:$0xff]
        %v482 = vld [vmem:[#allocation4 + $0x10] sm:$0xff]
        %v483 = vld [vmem:[#allocation4 + $0x18] sm:$0xff]
        %484 = vxpose.xlu0.b32.start [1/16] %v309, 128
        %485 = vxpose.xlu0.b32.cont [2/16] 0.0, 128
        %486 = vxpose.xlu0.b32.cont [3/16] 0.0, 128
        %487 = vxpose.xlu0.b32.cont [4/16] 0.0, 128
        %488 = vxpose.xlu0.b32.cont [5/16] 0.0, 128
        %489 = vxpose.xlu0.b32.cont [6/16] 0.0, 128
        %490 = vxpose.xlu0.b32.cont [7/16] 0.0, 128
        %491 = vxpose.xlu0.b32.cont [8/16] 0.0, 128
        %492 = vxpose.xlu0.b32.cont [9/16] 0.0, 128
        %493 = vxpose.xlu0.b32.cont [10/16] 0.0, 128
        %494 = vxpose.xlu0.b32.cont [11/16] 0.0, 128
        %495 = vxpose.xlu0.b32.cont [12/16] 0.0, 128
        %496 = vxpose.xlu0.b32.cont [13/16] 0.0, 128
        %497 = vxpose.xlu0.b32.cont [14/16] 0.0, 128
        %498 = vxpose.xlu0.b32.cont [15/16] 0.0, 128
        %499 = vxpose.xlu0.b32.end [16/16] 0.0, 128
        %v500 = vpop.trf.xlu0
        %v501 = vpop.trf.xlu0
        %v502 = vpop.trf.xlu0
        %v503 = vpop.trf.xlu0
        %v504 = vpop.trf.xlu0
        %v505 = vpop.trf.xlu0
        %v506 = vpop.trf.xlu0
        %v507 = vpop.trf.xlu0
        %v508 = vpop.trf.xlu0
        %v509 = vpop.trf.xlu0
        %v510 = vpop.trf.xlu0
        %v511 = vpop.trf.xlu0
        %v512 = vpop.trf.xlu0
        %v513 = vpop.trf.xlu0
        %v514 = vpop.trf.xlu0
        %v515 = vpop.trf.xlu0
        %v516 = vperm.slane %v500, 0
        %v517 = vmul.f32 %v480, %v516
        %v518 = vmul.f32 %v481, %v516
        %v519 = vmul.f32 %v482, %v516
        %v520 = vmul.f32 %v483, %v516
        %v521 = vadd.f32 %v517, %v469
        %v522 = vadd.f32 %v518, %v472
        %v523 = vadd.f32 %v519, %v475
        %v524 = vadd.f32 %v520, %v478
        %vm525 = vcmask 31744
        %526 = vst.msk [vmem:[#allocation4] sm:$0xff] %vm525, %v521
        %527 = vst.msk [vmem:[#allocation4 + $0x8] sm:$0xff] %vm525, %v522
        %528 = vst.msk [vmem:[#allocation4 + $0x10] sm:$0xff] %vm525, %v523
        %529 = vst.msk [vmem:[#allocation4 + $0x18] sm:$0xff] %vm525, %v524
        %p530 = scmp.eq.s32.totalorder %s26, 1
        // Predicated region
        $region41: #{tpu_custom_call.1} parent=27 // pred_check
          %p531 = pneg %p530
        $region42: #{tpu_custom_call.1} parent=27 // pred_check_branch
          %533 = sbr.rel (%p531) target = $region44
        $region43: #{tpu_custom_call.1} parent=27 // pred_region
          %v534 = vld [vmem:[#allocation3] sm:$0xf]
          %v535 = vrcp.pop %v534
          %v536 = vmul.f32 %v534, %v535
          %v537 = vsub.f32 1.0, %v536
          %v538 = vmul.f32 %v535, %v537
          %v539 = vadd.f32 %v535, %v538
          %vm540 = vweird.f32 %v534
          %vm541 = vweird.f32 %v535
          %vm542 = vmor %vm540, %vm541
          %v543 = vsel %vm542, %v535, %v539
          %v544 = vand.u32 2147483647, %v534
          %vm545 = vcmp.eq.f32.partialorder %v544, 8.507059e+37
          %v546 = vand.u32 %v534, 2147483648
          %v547 = vor.u32 1.1754944e-38, %v546
          %v548 = vsel %vm545, %v547, %v543
          %v549 = vld [vmem:[#allocation4] sm:$0xff]
          %v550 = vld [vmem:[#allocation4 + $0x8] sm:$0xff]
          %v551 = vld [vmem:[#allocation4 + $0x10] sm:$0xff]
          %v552 = vld [vmem:[#allocation4 + $0x18] sm:$0xff]
          %553 = vxpose.xlu0.b32.start [1/16] %v548, 128
          %554 = vxpose.xlu0.b32.cont [2/16] 0.0, 128
          %555 = vxpose.xlu0.b32.cont [3/16] 0.0, 128
          %556 = vxpose.xlu0.b32.cont [4/16] 0.0, 128
          %557 = vxpose.xlu0.b32.cont [5/16] 0.0, 128
          %558 = vxpose.xlu0.b32.cont [6/16] 0.0, 128
          %559 = vxpose.xlu0.b32.cont [7/16] 0.0, 128
          %560 = vxpose.xlu0.b32.cont [8/16] 0.0, 128
          %561 = vxpose.xlu0.b32.cont [9/16] 0.0, 128
          %562 = vxpose.xlu0.b32.cont [10/16] 0.0, 128
          %563 = vxpose.xlu0.b32.cont [11/16] 0.0, 128
          %564 = vxpose.xlu0.b32.cont [12/16] 0.0, 128
          %565 = vxpose.xlu0.b32.cont [13/16] 0.0, 128
          %566 = vxpose.xlu0.b32.cont [14/16] 0.0, 128
          %567 = vxpose.xlu0.b32.cont [15/16] 0.0, 128
          %568 = vxpose.xlu0.b32.end [16/16] 0.0, 128
          %v569 = vpop.trf.xlu0
          %v570 = vpop.trf.xlu0
          %v571 = vpop.trf.xlu0
          %v572 = vpop.trf.xlu0
          %v573 = vpop.trf.xlu0
          %v574 = vpop.trf.xlu0
          %v575 = vpop.trf.xlu0
          %v576 = vpop.trf.xlu0
          %v577 = vpop.trf.xlu0
          %v578 = vpop.trf.xlu0
          %v579 = vpop.trf.xlu0
          %v580 = vpop.trf.xlu0
          %v581 = vpop.trf.xlu0
          %v582 = vpop.trf.xlu0
          %v583 = vpop.trf.xlu0
          %v584 = vpop.trf.xlu0
          %v585 = vperm.slane %v569, 0
          %v586 = vmul.f32 %v549, %v585
          %v587 = vmul.f32 %v550, %v585
          %v588 = vmul.f32 %v551, %v585
          %v589 = vmul.f32 %v552, %v585
          %590 = vst.msk [vmem:[%s250] sm:$0xff] %vm525, %v586
          %591 = vst.msk [vmem:[%s250 + $0x8] sm:$0xff] %vm525, %v587
          %592 = vst.msk [vmem:[%s250 + $0x10] sm:$0xff] %vm525, %v588
          %593 = vst.msk [vmem:[%s250 + $0x18] sm:$0xff] %vm525, %v589
        $region44: #{tpu_custom_call.1} parent=27 // pred_fallthru
          _
        %s594 = smul.u32 4, %s25
        %p595 = scmp.lt.s32.totalorder %s24, 1
        %s596 = scalar_select %p595, %s24, 1
        %p597 = scmp.lt.s32.totalorder %s594, 7
        %s598 = scalar_select %p597, %s594, 7
        %s599 = smul.addr %s596, 8
        %s600 = sadd.s32 %s598, %s599
        %s601 = smul.addr %s600, 8
        %s602 = scalar_lea.vmem %s2, %s601
        // Predicated region
        $region45: #{tpu_custom_call.1} parent=27 // pred_check
          %p603 = pneg %p116
        $region46: #{tpu_custom_call.1} parent=27 // pred_check_branch
          %605 = sbr.rel (%p603) target = $region48
        $region47: #{tpu_custom_call.1} parent=27 // pred_region
          %s606 = smul.u32 4, %s25
        $region48: #{tpu_custom_call.1} parent=27 // pred_fallthru
          _
      $region28: #{tpu_custom_call.1} parent=5 // pred_fallthru
        _
      %p607 = scmp.le.s32.totalorder 2, %s14
      // Predicated region
      $region49: #{tpu_custom_call.1} parent=5 // pred_check
        %p608 = pneg %p607
      $region50: #{tpu_custom_call.1} parent=5 // pred_check_branch
        %610 = sbr.rel (%p608) target = $region52
      $region51: #{tpu_custom_call.1} parent=5 // pred_region
        %s611 = ssub.s32 %s14, 2
        // Predicated region
        $region53: #{tpu_custom_call.1} parent=51 // pred_check
          %p612 = pneg %p122
        $region54: #{tpu_custom_call.1} parent=51 // pred_check_branch
          %614 = sbr.rel (%p612) target = $region56
        $region55: #{tpu_custom_call.1} parent=51 // pred_region
          %s615 = smul.u32 4, %s28
          %p616 = scmp.lt.s32.totalorder %s27, 1
          %s617 = scalar_select %p616, %s27, 1
          %p618 = scmp.lt.s32.totalorder %s615, 7
          %s619 = scalar_select %p618, %s615, 7
          %s620 = smul.addr %s617, 8
          %s621 = sadd.s32 %s619, %s620
          %s622 = smul.addr %s621, 8
          %s623 = scalar_lea.vmem %s2, %s622
        $region56: #{tpu_custom_call.1} parent=51 // pred_fallthru
          _
      $region52: #{tpu_custom_call.1} parent=5 // pred_fallthru
        _
    $region6: #{tpu_custom_call.1} parent=1 // loop_footer
      %s18 = sadd.s32 1, %s14
    $region7: #{tpu_custom_call.1} parent=1 // loop_footer_branch
      %13 = sbr.rel target = $region3
    $region8: #{tpu_custom_call.1} parent=1 // loop_exit
      _
    %624 = vsyncpa [#allocation6], 1
    %s625 = scalar_lea.sflag [#allocation6], 1
    %626 = vsyncpa %s625, 1
    %627 = vsyncpa [#allocation8], 1
    %s628 = scalar_lea.sflag [#allocation8], 1
    %629 = vsyncpa %s628, 1

</llo_original>
